<compile_context>
chip_gen: v5e
topology: v5e:2x2
jax: 0.10.0
libtpu: 0.0.40
codegen_flags: <defaults>
</compile_context>

<pallas_src>
import jax
import jax.numpy as jnp
from jax.experimental import pallas as pl
from jax.experimental.pallas import tpu as pltpu

BN_EPS = 1e-5
LANE = 128
SUBLANE = 8


def _round_up(x, m):
    return (x + m - 1) // m * m


# --------------------------------------------------------------------------
# Fused kernel: one grid step == one GIN layer, x resident in VMEM scratch.
# --------------------------------------------------------------------------
def gin_fused_kernel(a_ref, x0_ref, vec_ref, w1_ref, w2_ref, o_ref, x_sc):
    l = pl.program_id(0)

    # Load the initial node features into the resident scratch on layer 0.
    @pl.when(l == 0)
    def _():
        x_sc[...] = x0_ref[...]

    x = x_sc[...]

    pre_scale = vec_ref[0:1, :]   # (1, Cpad)  outer-BN scale (identity for l==0)
    pre_shift = vec_ref[1:2, :]   # (1, Cpad)  outer-BN shift
    b1 = vec_ref[2:3, :]          # (1, Cpad)  Linear1 bias
    b2 = vec_ref[3:4, :]          # (1, Cpad)  Linear2 bias with inner BN folded in

    # dropout (eval: identity) + outer BatchNorm1d (eval) folded to scale/shift.
    x = x * pre_scale + pre_shift

    # GIN 'sum' aggregation with eps = 0:  (1+eps)*x + sum_j x_j == (A + I) @ x.
    agg = jnp.dot(a_ref[...], x, preferred_element_type=jnp.float32)

    # update-MLP layer 1: Linear -> ReLU  (inner BN folded into w2 / b2).
    h = jnp.dot(agg, w1_ref[...], preferred_element_type=jnp.float32) + b1
    h = jnp.maximum(h, 0.0)

    # update-MLP layer 2: Linear (BN-folded weights); MLP dropout is identity in eval.
    out = jnp.dot(h, w2_ref[...], preferred_element_type=jnp.float32) + b2

    x_sc[...] = out

    @pl.when(l == pl.num_programs(0) - 1)
    def _():
        o_ref[...] = out


# --------------------------------------------------------------------------
# Host-side wrapper: fold BNs, pad to lane-dense shapes, stack per-layer params.
# --------------------------------------------------------------------------
def gin_forward_pallas(A, x, params, outer_bns):
    N, Cin = x.shape
    L = len(params)
    Ch = params[0]["w1"].shape[1]
    Cout = params[-1]["w2"].shape[1]
    Cpad = _round_up(max(Cin, Ch, Cout), LANE)
    Npad = _round_up(N, SUBLANE)

    # A_hat = A + I (eps = 0), zero-padded so padded rows/cols stay inert.
    a_hat = jnp.zeros((Npad, Npad), jnp.float32)
    a_hat = a_hat.at[:N, :N].set(A + jnp.eye(N, dtype=jnp.float32))

    x0 = jnp.zeros((Npad, Cpad), jnp.float32).at[:N, :Cin].set(x)

    w1s, w2s, vecs = [], [], []
    for i, p in enumerate(params):
        cin, ch = p["w1"].shape
        cout = p["w2"].shape[1]

        # Outer dropout+BN before layer i (identity for i == 0) -> (scale, shift).
        if i == 0:
            pre_scale = jnp.ones((cin,), jnp.float32)
            pre_shift = jnp.zeros((cin,), jnp.float32)
        else:
            bn = outer_bns[i - 1]
            s = bn["gamma"][0] * jax.lax.rsqrt(bn["var"][0] + BN_EPS)
            pre_scale = s
            pre_shift = bn["beta"][0] - bn["mean"][0] * s

        # Inner BN (after Linear1 + ReLU) folded into w2 / b2.
        bn1 = p["bn_inner"]
        s1 = bn1["gamma"][0] * jax.lax.rsqrt(bn1["var"][0] + BN_EPS)
        t1 = bn1["beta"][0] - bn1["mean"][0] * s1
        w2f = s1[:, None] * p["w2"]
        b2f = t1 @ p["w2"] + p["b2"][0]

        # Zero-pad to lane-dense (Cpad) shapes; padded lanes stay exactly zero
        # because scales/shifts/biases/weights are padded with zeros.
        w1p = jnp.zeros((Cpad, Cpad), jnp.float32).at[:cin, :ch].set(p["w1"])
        w2p = jnp.zeros((Cpad, Cpad), jnp.float32).at[:ch, :cout].set(w2f)

        vec = jnp.zeros((4, Cpad), jnp.float32)
        vec = vec.at[0, :cin].set(pre_scale)
        vec = vec.at[1, :cin].set(pre_shift)
        vec = vec.at[2, :ch].set(p["b1"][0])
        vec = vec.at[3, :cout].set(b2f)

        w1s.append(w1p)
        w2s.append(w2p)
        vecs.append(vec)

    w1s = jnp.stack(w1s)    # (L, Cpad, Cpad)
    w2s = jnp.stack(w2s)    # (L, Cpad, Cpad)
    vecs = jnp.stack(vecs)  # (L, 4, Cpad)

    out_padded = pl.pallas_call(
        gin_fused_kernel,
        out_shape=jax.ShapeDtypeStruct((Npad, Cpad), jnp.float32),
        grid=(L,),
        in_specs=[
            pl.BlockSpec((Npad, Npad), lambda l: (0, 0)),           # A_hat (resident)
            pl.BlockSpec((Npad, Cpad), lambda l: (0, 0)),           # x0    (resident)
            pl.BlockSpec((None, 4, Cpad), lambda l: (l, 0, 0)),     # packed per-layer vectors
            pl.BlockSpec((None, Cpad, Cpad), lambda l: (l, 0, 0)),  # w1 per layer
            pl.BlockSpec((None, Cpad, Cpad), lambda l: (l, 0, 0)),  # w2 per layer (BN folded)
        ],
        out_specs=pl.BlockSpec((Npad, Cpad), lambda l: (0, 0)),
        scratch_shapes=[pltpu.VMEM((Npad, Cpad), jnp.float32)],
        compiler_params=pltpu.CompilerParams(
            dimension_semantics=("arbitrary",)),  # layers are sequential
    )(a_hat, x0, vecs, w1s, w2s)

    return out_padded[:N, :Cout]


# --------------------------------------------------------------------------
# Pure-JAX reference (eval-mode semantics of the PyTorch module).
# --------------------------------------------------------------------------
def gin_forward_ref(A, x, params, outer_bns):
    for i, p in enumerate(params):
        if i != 0:
            bn = outer_bns[i - 1]
            x = (x - bn["mean"]) * jax.lax.rsqrt(bn["var"] + BN_EPS) \
                * bn["gamma"] + bn["beta"]
        agg = x + A @ x
        h = agg @ p["w1"] + p["b1"]
        h = jnp.maximum(h, 0.0)
        bn1 = p["bn_inner"]
        h = (h - bn1["mean"]) * jax.lax.rsqrt(bn1["var"] + BN_EPS) \
            * bn1["gamma"] + bn1["beta"]
        x = h @ p["w2"] + p["b2"]
    return x


# --------------------------------------------------------------------------
# Deterministic synthetic parameters mirroring GIN.__init__ shapes.
# --------------------------------------------------------------------------
def random_bn(key, c):
    k1, k2, k3, k4 = jax.random.split(key, 4)
    return dict(gamma=1.0 + 0.1 * jax.random.normal(k1, (1, c), jnp.float32),
                beta=0.1 * jax.random.normal(k2, (1, c), jnp.float32),
                mean=0.1 * jax.random.normal(k3, (1, c), jnp.float32),
                var=0.5 + jnp.abs(jax.random.normal(k4, (1, c), jnp.float32)))


def random_linear(key, cin, cout):
    k1, k2 = jax.random.split(key)
    scale = 1.0 / jnp.sqrt(jnp.float32(cin))
    w = scale * jax.random.normal(k1, (cin, cout), jnp.float32)
    b = scale * jax.random.normal(k2, (1, cout), jnp.float32)
    return w, b


def init_gin_params(key, in_channels, hidden_channels, out_channels, n_layers):
    params = []
    dims = [(in_channels, hidden_channels, hidden_channels)]
    for _ in range(n_layers - 2):
        dims.append((hidden_channels, hidden_channels, hidden_channels))
    dims.append((hidden_channels, hidden_channels, out_channels))

    keys = jax.random.split(key, 3 * n_layers + (n_layers - 1))
    ki = 0
    for (cin, ch, cout) in dims:
        w1, b1 = random_linear(keys[ki], cin, ch); ki += 1
        bn_inner = random_bn(keys[ki], ch); ki += 1
        w2, b2 = random_linear(keys[ki], ch, cout); ki += 1
        params.append(dict(w1=w1, b1=b1, bn_inner=bn_inner, w2=w2, b2=b2))

    outer_bns = []
    for _ in range(n_layers - 1):
        outer_bns.append(random_bn(keys[ki], hidden_channels)); ki += 1
    return params, outer_bns


if __name__ == "__main__":
    key = jax.random.PRNGKey(0)
    N = 16
    in_channels = 8
    hidden_channels = 32
    out_channels = 16
    n_layers = 3

    k_graph, k_feat, k_param = jax.random.split(key, 3)

    # Random dense adjacency (A[dst, src] = 1 for an edge src -> dst), no self loops.
    adj = (jax.random.uniform(k_graph, (N, N)) < 0.3).astype(jnp.float32)
    adj = adj * (1.0 - jnp.eye(N, dtype=jnp.float32))

    x = jax.random.normal(k_feat, (N, in_channels), jnp.float32)

    params, outer_bns = init_gin_params(
        k_param, in_channels, hidden_channels, out_channels, n_layers)

    out = gin_forward_pallas(adj, x, params, outer_bns)
    out = jax.block_until_ready(out)

    ref = gin_forward_ref(adj, x, params, outer_bns)

    assert out.shape == (N, out_channels)
    assert jnp.all(jnp.isfinite(out))
    assert jnp.allclose(out, ref, rtol=5e-2, atol=5e-2)
    print("KERNEL_OK")
</pallas_src>

<mosaic_0001>
module attributes {stable_mosaic.version = 11 : i64} {
  func.func @gin_fused_kernel(%arg0: i32, %arg1: memref<16x16xf32, #tpu.memory_space<vmem>>, %arg2: memref<16x128xf32, #tpu.memory_space<vmem>>, %arg3: memref<1x4x128xf32, #tpu.memory_space<vmem>>, %arg4: memref<1x128x128xf32, #tpu.memory_space<vmem>>, %arg5: memref<1x128x128xf32, #tpu.memory_space<vmem>>, %arg6: memref<16x128xf32, #tpu.memory_space<vmem>>, %arg7: memref<16x128xf32, #tpu.memory_space<vmem>>) attributes {dimension_semantics = [#tpu.dimension_semantics<arbitrary>], iteration_bounds = array<i64: 3>, scalar_prefetch = 0 : i64, scratch_operands = 1 : i64, tpu.core_type = #tpu.core_type<tc>, window_params = [{pipeline_mode = #tpu.pipeline_mode<synchronous>, transform_indices = @transform_0, window_bounds = array<i64: 16, 16>}, {pipeline_mode = #tpu.pipeline_mode<synchronous>, transform_indices = @transform_1, window_bounds = array<i64: 16, 128>}, {transform_indices = @transform_2, window_bounds = array<i64: 1, 4, 128>}, {transform_indices = @transform_3, window_bounds = array<i64: 1, 128, 128>}, {transform_indices = @transform_4, window_bounds = array<i64: 1, 128, 128>}, {pipeline_mode = #tpu.pipeline_mode<synchronous>, transform_indices = @transform_5, window_bounds = array<i64: 16, 128>}]} {
    %c0_i32 = arith.constant 0 : i32
    %0 = arith.cmpi eq, %arg0, %c0_i32 : i32
    %1 = arith.extui %0 : i1 to i32
    %c0_i32_0 = arith.constant 0 : i32
    %2 = arith.cmpi ne, %1, %c0_i32_0 : i32
    scf.if %2 {
      %c0_25 = arith.constant 0 : index
      %c0_26 = arith.constant 0 : index
      %34 = vector.load %arg2[%c0_25, %c0_26] : memref<16x128xf32, #tpu.memory_space<vmem>>, vector<16x128xf32>
      %c0_27 = arith.constant 0 : index
      %c0_28 = arith.constant 0 : index
      %35 = vector.load %arg7[%c0_27, %c0_28] : memref<16x128xf32, #tpu.memory_space<vmem>>, vector<16x128xf32>
      tpu.vector_store %arg7[%c0_27, %c0_28], %34 {strides = array<i32>} : memref<16x128xf32, #tpu.memory_space<vmem>>, vector<16x128xf32>,
    } else {
    }
    %c0 = arith.constant 0 : index
    %c0_1 = arith.constant 0 : index
    %3 = vector.load %arg7[%c0, %c0_1] : memref<16x128xf32, #tpu.memory_space<vmem>>, vector<16x128xf32>
    %c0_2 = arith.constant 0 : index
    %c0_3 = arith.constant 0 : index
    %c0_4 = arith.constant 0 : index
    %4 = vector.load %arg3[%c0_2, %c0_3, %c0_4] : memref<1x4x128xf32, #tpu.memory_space<vmem>>, vector<1x1x128xf32>
    %5 = vector.shape_cast %4 : vector<1x1x128xf32> to vector<1x128xf32>
    %c0_5 = arith.constant 0 : index
    %c1 = arith.constant 1 : index
    %c0_6 = arith.constant 0 : index
    %6 = vector.load %arg3[%c0_5, %c1, %c0_6] : memref<1x4x128xf32, #tpu.memory_space<vmem>>, vector<1x1x128xf32>
    %7 = vector.shape_cast %6 : vector<1x1x128xf32> to vector<1x128xf32>
    %c0_7 = arith.constant 0 : index
    %c2 = arith.constant 2 : index
    %c0_8 = arith.constant 0 : index
    %8 = vector.load %arg3[%c0_7, %c2, %c0_8] : memref<1x4x128xf32, #tpu.memory_space<vmem>>, vector<1x1x128xf32>
    %9 = vector.shape_cast %8 : vector<1x1x128xf32> to vector<1x128xf32>
    %c0_9 = arith.constant 0 : index
    %c3 = arith.constant 3 : index
    %c0_10 = arith.constant 0 : index
    %10 = vector.load %arg3[%c0_9, %c3, %c0_10] : memref<1x4x128xf32, #tpu.memory_space<vmem>>, vector<1x1x128xf32>
    %11 = vector.shape_cast %10 : vector<1x1x128xf32> to vector<1x128xf32>
    %12 = vector.broadcast %5 : vector<1x128xf32> to vector<16x128xf32>
    %13 = arith.mulf %3, %12 : vector<16x128xf32>
    %14 = vector.broadcast %7 : vector<1x128xf32> to vector<16x128xf32>
    %15 = arith.addf %13, %14 : vector<16x128xf32>
    %c0_11 = arith.constant 0 : index
    %c0_12 = arith.constant 0 : index
    %16 = vector.load %arg1[%c0_11, %c0_12] : memref<16x16xf32, #tpu.memory_space<vmem>>, vector<16x16xf32>
    %cst = arith.constant dense<0.000000e+00> : vector<16x128xf32>
    %17 = tpu.matmul %16, %15, %cst {dimension_numbers = #tpu.dot_dimension_numbers<[1], [0], [0], [1], [0, 0, 1, 1], [], []>} : vector<16x16xf32>, vector<16x128xf32>, vector<16x128xf32> -> vector<16x128xf32>
    %c0_13 = arith.constant 0 : index
    %c0_14 = arith.constant 0 : index
    %c0_15 = arith.constant 0 : index
    %18 = vector.load %arg4[%c0_13, %c0_14, %c0_15] : memref<1x128x128xf32, #tpu.memory_space<vmem>>, vector<1x128x128xf32>
    %19 = vector.shape_cast %18 : vector<1x128x128xf32> to vector<128x128xf32>
    %cst_16 = arith.constant dense<0.000000e+00> : vector<16x128xf32>
    %20 = tpu.matmul %17, %19, %cst_16 {dimension_numbers = #tpu.dot_dimension_numbers<[1], [0], [0], [1], [0, 0, 1, 1], [], []>} : vector<16x128xf32>, vector<128x128xf32>, vector<16x128xf32> -> vector<16x128xf32>
    %21 = vector.broadcast %9 : vector<1x128xf32> to vector<16x128xf32>
    %22 = arith.addf %20, %21 : vector<16x128xf32>
    %cst_17 = arith.constant 0.000000e+00 : f32
    %23 = vector.broadcast %cst_17 : f32 to vector<16x128xf32>
    %24 = arith.maximumf %22, %23 : vector<16x128xf32>
    %c0_18 = arith.constant 0 : index
    %c0_19 = arith.constant 0 : index
    %c0_20 = arith.constant 0 : index
    %25 = vector.load %arg5[%c0_18, %c0_19, %c0_20] : memref<1x128x128xf32, #tpu.memory_space<vmem>>, vector<1x128x128xf32>
    %26 = vector.shape_cast %25 : vector<1x128x128xf32> to vector<128x128xf32>
    %cst_21 = arith.constant dense<0.000000e+00> : vector<16x128xf32>
    %27 = tpu.matmul %24, %26, %cst_21 {dimension_numbers = #tpu.dot_dimension_numbers<[1], [0], [0], [1], [0, 0, 1, 1], [], []>} : vector<16x128xf32>, vector<128x128xf32>, vector<16x128xf32> -> vector<16x128xf32>
    %28 = vector.broadcast %11 : vector<1x128xf32> to vector<16x128xf32>
    %29 = arith.addf %27, %28 : vector<16x128xf32>
    %c0_22 = arith.constant 0 : index
    %c0_23 = arith.constant 0 : index
    %30 = vector.load %arg7[%c0_22, %c0_23] : memref<16x128xf32, #tpu.memory_space<vmem>>, vector<16x128xf32>
    tpu.vector_store %arg7[%c0_22, %c0_23], %29 {strides = array<i32>} : memref<16x128xf32, #tpu.memory_space<vmem>>, vector<16x128xf32>,
    %c2_i32 = arith.constant 2 : i32
    %31 = arith.cmpi eq, %arg0, %c2_i32 : i32
    %32 = arith.extui %31 : i1 to i32
    %c0_i32_24 = arith.constant 0 : i32
    %33 = arith.cmpi ne, %32, %c0_i32_24 : i32
    scf.if %33 {
      %c0_25 = arith.constant 0 : index
      %c0_26 = arith.constant 0 : index
      %34 = vector.load %arg6[%c0_25, %c0_26] : memref<16x128xf32, #tpu.memory_space<vmem>>, vector<16x128xf32>
      tpu.vector_store %arg6[%c0_25, %c0_26], %29 {strides = array<i32>} : memref<16x128xf32, #tpu.memory_space<vmem>>, vector<16x128xf32>,
    } else {
    }
    return
  }
  func.func @transform_0(%arg0: i32) -> (i32, i32) {
    %c0_i32 = arith.constant 0 : i32
    %c0_i32_0 = arith.constant 0 : i32
    %c0_i32_1 = arith.constant 0 : i32
    return %c0_i32, %c0_i32_0 : i32, i32
  }
  func.func @transform_1(%arg0: i32) -> (i32, i32) {
    %c0_i32 = arith.constant 0 : i32
    %c0_i32_0 = arith.constant 0 : i32
    %c0_i32_1 = arith.constant 0 : i32
    return %c0_i32, %c0_i32_0 : i32, i32
  }
  func.func @transform_2(%arg0: i32) -> (i32, i32, i32) {
    %c0_i32 = arith.constant 0 : i32
    %c0_i32_0 = arith.constant 0 : i32
    %c0_i32_1 = arith.constant 0 : i32
    return %arg0, %c0_i32, %c0_i32_0 : i32, i32, i32
  }
  func.func @transform_3(%arg0: i32) -> (i32, i32, i32) {
    %c0_i32 = arith.constant 0 : i32
    %c0_i32_0 = arith.constant 0 : i32
    %c0_i32_1 = arith.constant 0 : i32
    return %arg0, %c0_i32, %c0_i32_0 : i32, i32, i32
  }
  func.func @transform_4(%arg0: i32) -> (i32, i32, i32) {
    %c0_i32 = arith.constant 0 : i32
    %c0_i32_0 = arith.constant 0 : i32
    %c0_i32_1 = arith.constant 0 : i32
    return %arg0, %c0_i32, %c0_i32_0 : i32, i32, i32
  }
  func.func @transform_5(%arg0: i32) -> (i32, i32) {
    %c0_i32 = arith.constant 0 : i32
    %c0_i32_0 = arith.constant 0 : i32
    %c0_i32_1 = arith.constant 0 : i32
    return %c0_i32, %c0_i32_0 : i32, i32
  }
}

</mosaic_0001>

<llo_original>
// kernel: tpu_custom_call.1
$region0: #{tpu_custom_call.1}
  #allocation0 [shape = 'u32[]', space=smem, size = 0x4, offset = 0x4, fixed_abs, tag = 'smem constant byte address 0x4 - core index']
  #allocation1 [shape = 'u32[72,128]{1,0:T(1,128)}', space=vmem, size = 0x9000, scoped, tag = 'internal scratch']
  #allocation2 [shape = 'f32[16,128]{1,0:T(8,128)}', space=vmem, size = 0x2000, scoped, tag = 'scratch operand']
  %s0 = inlined_call_operand.hbm [shape: f32[16,16], index: 0, kind: input, shape index: {}]
  %s1 = inlined_call_operand.hbm [shape: f32[16,128], index: 1, kind: input, shape index: {}]
  %s2 = inlined_call_operand.hbm [shape: f32[3,4,128], index: 2, kind: input, shape index: {}]
  %s3 = inlined_call_operand.hbm [shape: f32[3,128,128], index: 3, kind: input, shape index: {}]
  %s4 = inlined_call_operand.hbm [shape: f32[3,128,128], index: 4, kind: input, shape index: {}]
  %s5 = inlined_call_operand.hbm [shape: f32[16,128], index: 5, kind: output, shape index: {}]
  %s6 = sld [smem:[#allocation0]]
  $region81: #{tpu_custom_call.1} parent=0
    _
  %s8 = ssub.s32 1, %s6
  %s9 = scalar_select 0, %s8, %s6
  $region1: #{tpu_custom_call.1} parent=0
    #allocation3 [shape = 'u8[8192]{0}', space=vmem, size = 0x2000, scoped, tag = 'input window, operand 0, single buffered']
    #allocation4 [shape = 's32[2]{0}', space=sflag, size = 0x8, scoped, tag = 'scoped memory for tpu_custom_call.1']
    #allocation5 [shape = 's32[2]{0}', space=sflag, size = 0x8, scoped, tag = 'scoped memory for tpu_custom_call.1']
    #allocation6 [shape = 'u8[8192]{0}', space=vmem, size = 0x2000, scoped, tag = 'input window, operand 1, single buffered']
    #allocation7 [shape = 's32[1]{0}', space=sflag, size = 0x4, scoped, tag = 'scoped memory for tpu_custom_call.1']
    #allocation8 [shape = 'u8[4096]{0}', space=vmem, size = 0x1000, scoped, tag = 'input window, operand 2']
    #allocation9 [shape = 'u8[131072]{0}', space=vmem, size = 0x20000, scoped, tag = 'input window, operand 3']
    #allocation10 [shape = 'u8[131072]{0}', space=vmem, size = 0x20000, scoped, tag = 'input window, operand 4']
    #allocation11 [shape = 'u8[8192]{0}', space=vmem, size = 0x2000, scoped, tag = 'output window, operand 0, single buffered']
    %10 = vsyncpa [#allocation4], 0
    %11 = vsyncpa [#allocation7], 0
    %12 = vsyncpa [#allocation5], 0
    loop: start=0, step=1, limit=5
    $region2: #{tpu_custom_call.1} parent=1 // loop_pre_header
      _
    $region3: #{tpu_custom_call.1} parent=1 // loop_header
      %s14 = sphi 0, %s18
      %p15 = scmp.ge.s32.totalorder %s14, 5
      %s22 = sphi 0, %s22
      %s24 = sphi 0, %s22
      %s25 = sphi 0, %s24
      %s39 = sphi 0, %s25
      %s43 = sphi 0, %s43
      %s45 = sphi 0, %s43
      %s46 = sphi 0, %s45
      %s60 = sphi 0, %s46
      %s66 = sphi 0, %s68
      %s69 = sphi 0, %s66
      %s70 = sphi 0, %s69
      %s86 = sphi 0, %s70
      %s92 = sphi 0, %s94
      %s95 = sphi 0, %s92
      %s96 = sphi 0, %s95
      %s112 = sphi 0, %s96
      %s118 = sphi 0, %s120
      %s121 = sphi 0, %s118
      %s122 = sphi 0, %s121
      %s138 = sphi 0, %s122
      %s142 = sphi 0, %s142
      %s144 = sphi 0, %s142
      %s145 = sphi 0, %s144
      %s159 = sphi 0, %s145
    $region4: #{tpu_custom_call.1} parent=1 // loop_header_branch
      %17 = sbr.rel (%p15) target = $region8
    $region5: #{tpu_custom_call.1} parent=1 // loop_body
      %s19 = ssub.s32 %s14, 1
      %s20 = ssub.s32 %s14, 2
      %s21 = sadd.s32 %s14, 1
      %s23 = sadd.s32 %s22, 1
      %p26 = scmp.eq.s32.totalorder %s14, 2
      %p27 = scmp.ne.s32.totalorder %s22, %s24
      %p28 = scmp.eq.s32.totalorder %s14, 0
      %p29 = por %p27, %p28
      %p30 = scmp.ne.s32.totalorder %s22, %s24
      %p31 = scmp.eq.s32.totalorder %s19, 2
      %p32 = por %p30, %p31
      %p33 = scmp.ne.s32.totalorder %s24, %s25
      %p34 = scmp.eq.s32.totalorder %s19, 0
      %p35 = por %p33, %p34
      %p36 = scmp.ne.s32.totalorder %s24, %s25
      %p37 = scmp.eq.s32.totalorder %s20, 2
      %p38 = por %p36, %p37
      %p40 = scmp.ne.s32.totalorder %s25, %s39
      %p41 = scmp.eq.s32.totalorder %s20, 0
      %p42 = por %p40, %p41
      %s44 = sadd.s32 %s43, 1
      %p47 = scmp.eq.s32.totalorder %s14, 2
      %p48 = scmp.ne.s32.totalorder %s43, %s45
      %p49 = scmp.eq.s32.totalorder %s14, 0
      %p50 = por %p48, %p49
      %p51 = scmp.ne.s32.totalorder %s43, %s45
      %p52 = scmp.eq.s32.totalorder %s19, 2
      %p53 = por %p51, %p52
      %p54 = scmp.ne.s32.totalorder %s45, %s46
      %p55 = scmp.eq.s32.totalorder %s19, 0
      %p56 = por %p54, %p55
      %p57 = scmp.ne.s32.totalorder %s45, %s46
      %p58 = scmp.eq.s32.totalorder %s20, 2
      %p59 = por %p57, %p58
      %p61 = scmp.ne.s32.totalorder %s46, %s60
      %p62 = scmp.eq.s32.totalorder %s20, 0
      %p63 = por %p61, %p62
      %s64 = ssub.s32 %s14, %s21
      %p65 = scmp.eq.s32.totalorder %s64, 0
      %s67 = sadd.s32 %s66, 1
      %s68 = scalar_select %p65, %s66, %s67
      %p71 = pneg %p65
      %p72 = scmp.eq.s32.totalorder %s14, 2
      %p73 = por %p71, %p72
      %p74 = scmp.ne.s32.totalorder %s66, %s69
      %p75 = scmp.eq.s32.totalorder %s14, 0
      %p76 = por %p74, %p75
      %p77 = scmp.ne.s32.totalorder %s66, %s69
      %p78 = scmp.eq.s32.totalorder %s19, 2
      %p79 = por %p77, %p78
      %p80 = scmp.ne.s32.totalorder %s69, %s70
      %p81 = scmp.eq.s32.totalorder %s19, 0
      %p82 = por %p80, %p81
      %p83 = scmp.ne.s32.totalorder %s69, %s70
      %p84 = scmp.eq.s32.totalorder %s20, 2
      %p85 = por %p83, %p84
      %p87 = scmp.ne.s32.totalorder %s70, %s86
      %p88 = scmp.eq.s32.totalorder %s20, 0
      %p89 = por %p87, %p88
      %s90 = ssub.s32 %s14, %s21
      %p91 = scmp.eq.s32.totalorder %s90, 0
      %s93 = sadd.s32 %s92, 1
      %s94 = scalar_select %p91, %s92, %s93
      %p97 = pneg %p91
      %p98 = scmp.eq.s32.totalorder %s14, 2
      %p99 = por %p97, %p98
      %p100 = scmp.ne.s32.totalorder %s92, %s95
      %p101 = scmp.eq.s32.totalorder %s14, 0
      %p102 = por %p100, %p101
      %p103 = scmp.ne.s32.totalorder %s92, %s95
      %p104 = scmp.eq.s32.totalorder %s19, 2
      %p105 = por %p103, %p104
      %p106 = scmp.ne.s32.totalorder %s95, %s96
      %p107 = scmp.eq.s32.totalorder %s19, 0
      %p108 = por %p106, %p107
      %p109 = scmp.ne.s32.totalorder %s95, %s96
      %p110 = scmp.eq.s32.totalorder %s20, 2
      %p111 = por %p109, %p110
      %p113 = scmp.ne.s32.totalorder %s96, %s112
      %p114 = scmp.eq.s32.totalorder %s20, 0
      %p115 = por %p113, %p114
      %s116 = ssub.s32 %s14, %s21
      %p117 = scmp.eq.s32.totalorder %s116, 0
      %s119 = sadd.s32 %s118, 1
      %s120 = scalar_select %p117, %s118, %s119
      %p123 = pneg %p117
      %p124 = scmp.eq.s32.totalorder %s14, 2
      %p125 = por %p123, %p124
      %p126 = scmp.ne.s32.totalorder %s118, %s121
      %p127 = scmp.eq.s32.totalorder %s14, 0
      %p128 = por %p126, %p127
      %p129 = scmp.ne.s32.totalorder %s118, %s121
      %p130 = scmp.eq.s32.totalorder %s19, 2
      %p131 = por %p129, %p130
      %p132 = scmp.ne.s32.totalorder %s121, %s122
      %p133 = scmp.eq.s32.totalorder %s19, 0
      %p134 = por %p132, %p133
      %p135 = scmp.ne.s32.totalorder %s121, %s122
      %p136 = scmp.eq.s32.totalorder %s20, 2
      %p137 = por %p135, %p136
      %p139 = scmp.ne.s32.totalorder %s122, %s138
      %p140 = scmp.eq.s32.totalorder %s20, 0
      %p141 = por %p139, %p140
      %s143 = sadd.s32 %s142, 1
      %p146 = scmp.eq.s32.totalorder %s14, 2
      %p147 = scmp.ne.s32.totalorder %s142, %s144
      %p148 = scmp.eq.s32.totalorder %s14, 0
      %p149 = por %p147, %p148
      %p150 = scmp.ne.s32.totalorder %s142, %s144
      %p151 = scmp.eq.s32.totalorder %s19, 2
      %p152 = por %p150, %p151
      %p153 = scmp.ne.s32.totalorder %s144, %s145
      %p154 = scmp.eq.s32.totalorder %s19, 0
      %p155 = por %p153, %p154
      %p156 = scmp.ne.s32.totalorder %s144, %s145
      %p157 = scmp.eq.s32.totalorder %s20, 2
      %p158 = por %p156, %p157
      %p160 = scmp.ne.s32.totalorder %s145, %s159
      %p161 = scmp.eq.s32.totalorder %s20, 0
      %p162 = por %p160, %p161
      %p163 = scmp.le.s32.totalorder 1, %s14
      %p164 = scmp.lt.s32.totalorder %s14, 4
      %p165 = pnand %p163, %p164
      %p166 = pneg %p165
      // Predicated region
      $region9: #{tpu_custom_call.1} parent=5 // pred_check
        _
      $region10: #{tpu_custom_call.1} parent=5 // pred_check_branch
        %168 = sbr.rel (%p165) target = $region12
      $region11: #{tpu_custom_call.1} parent=5 // pred_region
        %s169 = ssub.s32 %s14, 1
        // Predicated region
        $region13: #{tpu_custom_call.1} parent=11 // pred_check
          %p170 = pneg %p35
        $region14: #{tpu_custom_call.1} parent=11 // pred_check_branch
          %172 = sbr.rel (%p170) target = $region16
        $region15: #{tpu_custom_call.1} parent=11 // pred_region
          %174 = vsyncadd [#allocation4], 0
          %s175 = sshll.u32 %s0, 4
          %s176 = int_to_ptr.hbm [resolvable:$true] %s175
          %s177 = sshll.u32 [#allocation3], 4
          %s178 = int_to_ptr.vmem [resolvable:$true] %s177
          %183 = dma.hbm_to_vmem [thread:$0]  %s176, 256, %s178, [#allocation4], 128, 128, 8
        $region16: #{tpu_custom_call.1} parent=11 // pred_fallthru
          _
        // Predicated region
        $region17: #{tpu_custom_call.1} parent=11 // pred_check
          %p184 = pneg %p56
        $region18: #{tpu_custom_call.1} parent=11 // pred_check_branch
          %186 = sbr.rel (%p184) target = $region20
        $region19: #{tpu_custom_call.1} parent=11 // pred_region
          %188 = vsyncadd [#allocation7], 0
          %s189 = sshll.u32 %s1, 4
          %s190 = int_to_ptr.hbm [resolvable:$true] %s189
          %s191 = sshll.u32 [#allocation6], 4
          %s192 = int_to_ptr.vmem [resolvable:$true] %s191
          %197 = dma.hbm_to_vmem [thread:$0]  %s190, 256, %s192, [#allocation7], 128, 128, 8
        $region20: #{tpu_custom_call.1} parent=11 // pred_fallthru
          _
      $region12: #{tpu_custom_call.1} parent=5 // pred_fallthru
        _
      %p198 = scmp.lt.s32.totalorder %s14, 3
      // Predicated region
      $region21: #{tpu_custom_call.1} parent=5 // pred_check
        %p199 = pneg %p198
      $region22: #{tpu_custom_call.1} parent=5 // pred_check_branch
        %201 = sbr.rel (%p199) target = $region24
      $region23: #{tpu_custom_call.1} parent=5 // pred_region
        // Predicated region
        $region25: #{tpu_custom_call.1} parent=23 // pred_check
          %p202 = pneg %p76
        $region26: #{tpu_custom_call.1} parent=23 // pred_check_branch
          %204 = sbr.rel (%p202) target = $region28
        $region27: #{tpu_custom_call.1} parent=23 // pred_region
          %s205 = sand.u32 %s14, 1
          %s206 = scalar_lea.sflag [#allocation4], %s205
          %s207 = sand.u32 %s66, 1
          %s208 = smul.addr %s207, 4
          %s209 = scalar_lea.vmem [#allocation8], %s208
          %211 = vsyncadd %s206, 0
          %s212 = smul.addr %s14, 4
          %s213 = scalar_lea.hbm %s2, %s212
          %s215 = sshll.u32 %s213, 4
          %s216 = int_to_ptr.hbm [resolvable:$true] %s215
          %s217 = sshll.u32 %s209, 4
          %s218 = int_to_ptr.vmem [resolvable:$true] %s217
          %220 = dma.hbm_to_vmem [thread:$0]  %s216, 64, %s218, %s206
        $region28: #{tpu_custom_call.1} parent=23 // pred_fallthru
          _
        // Predicated region
        $region29: #{tpu_custom_call.1} parent=23 // pred_check
          %p221 = pneg %p102
        $region30: #{tpu_custom_call.1} parent=23 // pred_check_branch
          %223 = sbr.rel (%p221) target = $region32
        $region31: #{tpu_custom_call.1} parent=23 // pred_region
          %s224 = sand.u32 %s14, 1
          %s225 = scalar_lea.sflag [#allocation4], %s224
          %s226 = sand.u32 %s92, 1
          %s227 = smul.addr %s226, 128
          %s228 = scalar_lea.vmem [#allocation9], %s227
          %230 = vsyncadd %s225, 0
          %s231 = smul.addr %s14, 16
          %s232 = smul.addr %s231, 8
          %s233 = scalar_lea.hbm %s3, %s232
          %s234 = sshll.u32 %s233, 4
          %s235 = int_to_ptr.hbm [resolvable:$true] %s234
          %s236 = sshll.u32 %s228, 4
          %s237 = int_to_ptr.vmem [resolvable:$true] %s236
          %242 = dma.hbm_to_vmem [thread:$0]  %s235, 2048, %s237, %s225, 128, 128, 8
        $region32: #{tpu_custom_call.1} parent=23 // pred_fallthru
          _
        // Predicated region
        $region33: #{tpu_custom_call.1} parent=23 // pred_check
          %p243 = pneg %p128
        $region34: #{tpu_custom_call.1} parent=23 // pred_check_branch
          %245 = sbr.rel (%p243) target = $region36
        $region35: #{tpu_custom_call.1} parent=23 // pred_region
          %s246 = sand.u32 %s14, 1
          %s247 = scalar_lea.sflag [#allocation4], %s246
          %s248 = sand.u32 %s118, 1
          %s249 = smul.addr %s248, 128
          %s250 = scalar_lea.vmem [#allocation10], %s249
          %252 = vsyncadd %s247, 0
          %s253 = smul.addr %s14, 16
          %s254 = smul.addr %s253, 8
          %s255 = scalar_lea.hbm %s4, %s254
          %s256 = sshll.u32 %s255, 4
          %s257 = int_to_ptr.hbm [resolvable:$true] %s256
          %s258 = sshll.u32 %s250, 4
          %s259 = int_to_ptr.vmem [resolvable:$true] %s258
          %264 = dma.hbm_to_vmem [thread:$0]  %s257, 2048, %s259, %s247, 128, 128, 8
        $region36: #{tpu_custom_call.1} parent=23 // pred_fallthru
          _
      $region24: #{tpu_custom_call.1} parent=5 // pred_fallthru
        _
      %p265 = scmp.le.s32.totalorder 1, %s14
      %p266 = scmp.lt.s32.totalorder %s14, 4
      %p267 = pnand %p265, %p266
      %p268 = pneg %p267
      // Predicated region
      $region37: #{tpu_custom_call.1} parent=5 // pred_check
        _
      $region38: #{tpu_custom_call.1} parent=5 // pred_check_branch
        %270 = sbr.rel (%p267) target = $region40
      $region39: #{tpu_custom_call.1} parent=5 // pred_region
        %s271 = ssub.s32 %s14, 1
        // Predicated region
        $region41: #{tpu_custom_call.1} parent=39 // pred_check
          %p272 = pneg %p35
        $region42: #{tpu_custom_call.1} parent=39 // pred_check_branch
          %274 = sbr.rel (%p272) target = $region44
        $region43: #{tpu_custom_call.1} parent=39 // pred_region
          %276 = dma.done [#allocation4], 256
        $region44: #{tpu_custom_call.1} parent=39 // pred_fallthru
          _
        // Predicated region
        $region45: #{tpu_custom_call.1} parent=39 // pred_check
          %p277 = pneg %p56
        $region46: #{tpu_custom_call.1} parent=39 // pred_check_branch
          %279 = sbr.rel (%p277) target = $region48
        $region47: #{tpu_custom_call.1} parent=39 // pred_region
          %281 = dma.done [#allocation7], 256
        $region48: #{tpu_custom_call.1} parent=39 // pred_fallthru
          _
        %s282 = sand.u32 %s19, 1
        %s283 = scalar_lea.sflag [#allocation4], %s282
        %s284 = sand.u32 %s69, 1
        %s285 = smul.addr %s284, 4
        %s286 = scalar_lea.vmem [#allocation8], %s285
        // Predicated region
        $region49: #{tpu_custom_call.1} parent=39 // pred_check
          %p287 = pneg %p82
        $region50: #{tpu_custom_call.1} parent=39 // pred_check_branch
          %289 = sbr.rel (%p287) target = $region52
        $region51: #{tpu_custom_call.1} parent=39 // pred_region
          %291 = dma.done %s283, 64
        $region52: #{tpu_custom_call.1} parent=39 // pred_fallthru
          _
        %s292 = sand.u32 %s19, 1
        %s293 = scalar_lea.sflag [#allocation4], %s292
        %s294 = sand.u32 %s95, 1
        %s295 = smul.addr %s294, 128
        %s296 = scalar_lea.vmem [#allocation9], %s295
        // Predicated region
        $region53: #{tpu_custom_call.1} parent=39 // pred_check
          %p297 = pneg %p108
        $region54: #{tpu_custom_call.1} parent=39 // pred_check_branch
          %299 = sbr.rel (%p297) target = $region56
        $region55: #{tpu_custom_call.1} parent=39 // pred_region
          %301 = dma.done %s293, 2048
        $region56: #{tpu_custom_call.1} parent=39 // pred_fallthru
          _
        %s302 = sand.u32 %s19, 1
        %s303 = scalar_lea.sflag [#allocation4], %s302
        %s304 = sand.u32 %s121, 1
        %s305 = smul.addr %s304, 128
        %s306 = scalar_lea.vmem [#allocation10], %s305
        // Predicated region
        $region57: #{tpu_custom_call.1} parent=39 // pred_check
          %p307 = pneg %p134
        $region58: #{tpu_custom_call.1} parent=39 // pred_check_branch
          %309 = sbr.rel (%p307) target = $region60
        $region59: #{tpu_custom_call.1} parent=39 // pred_region
          %311 = dma.done %s303, 2048
        $region60: #{tpu_custom_call.1} parent=39 // pred_fallthru
          _
        %p312 = pneg %p35
        %p313 = pneg %p32
        %p314 = pneg %p56
        %p315 = pneg %p53
        %s316 = sand.u32 %s19, 1
        %s317 = scalar_lea.sflag [#allocation4], %s316
        %s318 = sand.u32 %s69, 1
        %s319 = smul.addr %s318, 4
        %s320 = scalar_lea.vmem [#allocation8], %s319
        %p321 = pneg %p82
        %p322 = pneg %p79
        %s323 = sand.u32 %s19, 1
        %s324 = scalar_lea.sflag [#allocation4], %s323
        %s325 = sand.u32 %s95, 1
        %s326 = smul.addr %s325, 128
        %s327 = scalar_lea.vmem [#allocation9], %s326
        %p328 = pneg %p108
        %p329 = pneg %p105
        %s330 = sand.u32 %s19, 1
        %s331 = scalar_lea.sflag [#allocation4], %s330
        %s332 = sand.u32 %s121, 1
        %s333 = smul.addr %s332, 128
        %s334 = scalar_lea.vmem [#allocation10], %s333
        %p335 = pneg %p134
        %p336 = pneg %p131
        %p337 = pneg %p155
        %p338 = pneg %p152
        %p339 = scmp.eq.s32.totalorder %s19, 0
        // Predicated region
        $region61: #{tpu_custom_call.1} parent=39 // pred_check
          %p340 = pneg %p339
        $region62: #{tpu_custom_call.1} parent=39 // pred_check_branch
          %342 = sbr.rel (%p340) target = $region64
        $region63: #{tpu_custom_call.1} parent=39 // pred_region
          %v343 = vld [vmem:[#allocation6] sm:$0xff]
          %v344 = vld [vmem:[#allocation6 + $0x8] sm:$0xff]
          %345 = vst [vmem:[#allocation2] sm:$0xff] %v343
          %346 = vst [vmem:[#allocation2 + $0x8] sm:$0xff] %v344
        $region64: #{tpu_custom_call.1} parent=39 // pred_fallthru
          _
        %v347 = vld [vmem:[#allocation2] sm:$0xff]
        %v348 = vld [vmem:[#allocation2 + $0x8] sm:$0xff]
        %v349 = vld [vmem:[%s286] sm:$0x1]
        %v350 = vld [vmem:[%s286 + $0x1] sm:$0x1]
        %v351 = vld [vmem:[%s286 + $0x2] sm:$0x1]
        %v352 = vld [vmem:[%s286 + $0x3] sm:$0x1]
        %v353 = vperm.slane %v349, 0
        %v354 = vmul.f32 %v347, %v353
        %v355 = vmul.f32 %v348, %v353
        %v356 = vperm.slane %v350, 0
        %v357 = vadd.f32 %v354, %v356
        %v358 = vadd.f32 %v355, %v356
        %v359 = vld [vmem:[#allocation3] sm:$0xff]
        %v360 = vld [vmem:[#allocation3 + $0x8] sm:$0xff]
        %vm361 = vcmask 130048
        %v363 = vsel %vm361, %v359, 0
        %v366 = vsel %vm361, %v360, 0
        %368 = vmatpush.msra.mxu0 0.0
        %369 = vmatpush.msra.mxu0 0.0
        %370 = vmatpush.msra.mxu0 0.0
        %371 = vmatpush.msra.mxu0 0.0
        %372 = vmatpush.msra.mxu0 0.0
        %373 = vmatpush.msra.mxu0 0.0
        %374 = vmatpush.msra.mxu0 0.0
        %375 = vmatpush.msra.mxu0 0.0
        %376 = vmatpush.msra.mxu0 0.0
        %377 = vmatpush.msra.mxu0 0.0
        %378 = vmatpush.msra.mxu0 0.0
        %379 = vmatpush.msra.mxu0 0.0
        %380 = vmatpush.msra.mxu0 0.0
        %381 = vmatpush.msra.mxu0 0.0
        %382 = vmatpush.msra.mxu0 %v358
        %383 = vmatpush.msra.mxu0 %v357
        %384 = vmatmul.f32.gmra.mxu0 %v363
        %v385 = vpop.f32.mrf.mxu0
        %v386 = vadd.f32 0.0, %v385
        %387 = vmatmul.f32.gmra.mxu0 %v366
        %v388 = vpop.f32.mrf.mxu0
        %v389 = vadd.f32 0.0, %v388
        %390 = vdwg.mxu0
        %v391 = vld [vmem:[%s296] sm:$0xff]
        %v392 = vld [vmem:[%s296 + $0x8] sm:$0xff]
        %v393 = vld [vmem:[%s296 + $0x10] sm:$0xff]
        %v394 = vld [vmem:[%s296 + $0x18] sm:$0xff]
        %v395 = vld [vmem:[%s296 + $0x20] sm:$0xff]
        %v396 = vld [vmem:[%s296 + $0x28] sm:$0xff]
        %v397 = vld [vmem:[%s296 + $0x30] sm:$0xff]
        %v398 = vld [vmem:[%s296 + $0x38] sm:$0xff]
        %v399 = vld [vmem:[%s296 + $0x40] sm:$0xff]
        %v400 = vld [vmem:[%s296 + $0x48] sm:$0xff]
        %v401 = vld [vmem:[%s296 + $0x50] sm:$0xff]
        %v402 = vld [vmem:[%s296 + $0x58] sm:$0xff]
        %v403 = vld [vmem:[%s296 + $0x60] sm:$0xff]
        %v404 = vld [vmem:[%s296 + $0x68] sm:$0xff]
        %v405 = vld [vmem:[%s296 + $0x70] sm:$0xff]
        %v406 = vld [vmem:[%s296 + $0x78] sm:$0xff]
        %v407 = vperm.slane %v351, 0
        %408 = vmatpush.msra.mxu0 %v406
        %409 = vmatpush.msra.mxu0 %v405
        %410 = vmatpush.msra.mxu0 %v404
        %411 = vmatpush.msra.mxu0 %v403
        %412 = vmatpush.msra.mxu0 %v402
        %413 = vmatpush.msra.mxu0 %v401
        %414 = vmatpush.msra.mxu0 %v400
        %415 = vmatpush.msra.mxu0 %v399
        %416 = vmatpush.msra.mxu0 %v398
        %417 = vmatpush.msra.mxu0 %v397
        %418 = vmatpush.msra.mxu0 %v396
        %419 = vmatpush.msra.mxu0 %v395
        %420 = vmatpush.msra.mxu0 %v394
        %421 = vmatpush.msra.mxu0 %v393
        %422 = vmatpush.msra.mxu0 %v392
        %423 = vmatpush.msra.mxu0 %v391
        %424 = vmatmul.f32.gmra.mxu0 %v386
        %v425 = vpop.f32.mrf.mxu0
        %v426 = vadd.f32 %v407, %v425
        %427 = vmatmul.f32.gmra.mxu0 %v389
        %v428 = vpop.f32.mrf.mxu0
        %v429 = vadd.f32 %v407, %v428
        %430 = vdwg.mxu0
        %v431 = vmax.f32 %v426, 0.0
        %v432 = vmax.f32 %v429, 0.0
        %v433 = vld [vmem:[%s306] sm:$0xff]
        %v434 = vld [vmem:[%s306 + $0x8] sm:$0xff]
        %v435 = vld [vmem:[%s306 + $0x10] sm:$0xff]
        %v436 = vld [vmem:[%s306 + $0x18] sm:$0xff]
        %v437 = vld [vmem:[%s306 + $0x20] sm:$0xff]
        %v438 = vld [vmem:[%s306 + $0x28] sm:$0xff]
        %v439 = vld [vmem:[%s306 + $0x30] sm:$0xff]
        %v440 = vld [vmem:[%s306 + $0x38] sm:$0xff]
        %v441 = vld [vmem:[%s306 + $0x40] sm:$0xff]
        %v442 = vld [vmem:[%s306 + $0x48] sm:$0xff]
        %v443 = vld [vmem:[%s306 + $0x50] sm:$0xff]
        %v444 = vld [vmem:[%s306 + $0x58] sm:$0xff]
        %v445 = vld [vmem:[%s306 + $0x60] sm:$0xff]
        %v446 = vld [vmem:[%s306 + $0x68] sm:$0xff]
        %v447 = vld [vmem:[%s306 + $0x70] sm:$0xff]
        %v448 = vld [vmem:[%s306 + $0x78] sm:$0xff]
        %v449 = vperm.slane %v352, 0
        %450 = vmatpush.msra.mxu0 %v448
        %451 = vmatpush.msra.mxu0 %v447
        %452 = vmatpush.msra.mxu0 %v446
        %453 = vmatpush.msra.mxu0 %v445
        %454 = vmatpush.msra.mxu0 %v444
        %455 = vmatpush.msra.mxu0 %v443
        %456 = vmatpush.msra.mxu0 %v442
        %457 = vmatpush.msra.mxu0 %v441
        %458 = vmatpush.msra.mxu0 %v440
        %459 = vmatpush.msra.mxu0 %v439
        %460 = vmatpush.msra.mxu0 %v438
        %461 = vmatpush.msra.mxu0 %v437
        %462 = vmatpush.msra.mxu0 %v436
        %463 = vmatpush.msra.mxu0 %v435
        %464 = vmatpush.msra.mxu0 %v434
        %465 = vmatpush.msra.mxu0 %v433
        %466 = vmatmul.f32.gmra.mxu0 %v431
        %v467 = vpop.f32.mrf.mxu0
        %v468 = vadd.f32 %v449, %v467
        %469 = vmatmul.f32.gmra.mxu0 %v432
        %v470 = vpop.f32.mrf.mxu0
        %v471 = vadd.f32 %v449, %v470
        %472 = vdwg.mxu0
        %473 = vst [vmem:[#allocation2] sm:$0xff] %v468
        %474 = vst [vmem:[#allocation2 + $0x8] sm:$0xff] %v471
        %p475 = scmp.eq.s32.totalorder %s19, 2
        // Predicated region
        $region65: #{tpu_custom_call.1} parent=39 // pred_check
          %p476 = pneg %p475
        $region66: #{tpu_custom_call.1} parent=39 // pred_check_branch
          %478 = sbr.rel (%p476) target = $region68
        $region67: #{tpu_custom_call.1} parent=39 // pred_region
          %479 = vst [vmem:[#allocation11] sm:$0xff] %v468
          %480 = vst [vmem:[#allocation11 + $0x8] sm:$0xff] %v471
        $region68: #{tpu_custom_call.1} parent=39 // pred_fallthru
          _
        // Predicated region
        $region69: #{tpu_custom_call.1} parent=39 // pred_check
          %p481 = pneg %p152
        $region70: #{tpu_custom_call.1} parent=39 // pred_check_branch
          %483 = sbr.rel (%p481) target = $region72
        $region71: #{tpu_custom_call.1} parent=39 // pred_region
          %485 = vsyncadd [#allocation5], 0
          %s486 = sshll.u32 [#allocation11], 4
          %s487 = int_to_ptr.vmem [resolvable:$true] %s486
          %s488 = sshll.u32 %s5, 4
          %s489 = int_to_ptr.hbm [resolvable:$true] %s488
          %494 = dma.vmem_to_hbm [thread:$0]  %s487, 256, %s489, [#allocation5], 128, 128, 8
        $region72: #{tpu_custom_call.1} parent=39 // pred_fallthru
          _
        // Predicated region
        $region73: #{tpu_custom_call.1} parent=39 // pred_check
          %p495 = pneg %p152
        $region74: #{tpu_custom_call.1} parent=39 // pred_check_branch
          %497 = sbr.rel (%p495) target = $region76
        $region75: #{tpu_custom_call.1} parent=39 // pred_region
          %499 = dma.done [#allocation5], 256
        $region76: #{tpu_custom_call.1} parent=39 // pred_fallthru
          _
      $region40: #{tpu_custom_call.1} parent=5 // pred_fallthru
        _
      %p500 = scmp.le.s32.totalorder 2, %s14
      // Predicated region
      $region77: #{tpu_custom_call.1} parent=5 // pred_check
        %p501 = pneg %p500
      $region78: #{tpu_custom_call.1} parent=5 // pred_check_branch
        %503 = sbr.rel (%p501) target = $region80
      $region79: #{tpu_custom_call.1} parent=5 // pred_region
        %s504 = ssub.s32 %s14, 2
      $region80: #{tpu_custom_call.1} parent=5 // pred_fallthru
        _
    $region6: #{tpu_custom_call.1} parent=1 // loop_footer
      %s18 = sadd.s32 1, %s14
    $region7: #{tpu_custom_call.1} parent=1 // loop_footer_branch
      %13 = sbr.rel target = $region3
    $region8: #{tpu_custom_call.1} parent=1 // loop_exit
      _
    %505 = vsyncpa [#allocation4], 1
    %s506 = scalar_lea.sflag [#allocation4], 1
    %507 = vsyncpa %s506, 1
    %508 = vsyncpa [#allocation7], 1
    %509 = vsyncpa [#allocation5], 1
    %s510 = scalar_lea.sflag [#allocation5], 1
    %511 = vsyncpa %s510, 1

</llo_original>
